<compile_context>
chip_gen: v5e
topology: v5e:2x2
jax: 0.10.0
libtpu: 0.0.40
codegen_flags: <defaults>
</compile_context>

<pallas_src>
import functools
import math

import jax
import jax.numpy as jnp
from jax.experimental import pallas as pl
from jax.experimental.pallas import tpu as pltpu


def _xlogx(p: float) -> float:
    """Trace-time x*log(x) with 0*log(0) := 0."""
    return 0.0 if p <= 0.0 else p * math.log(p)


def _round_up(a: int, b: int) -> int:
    return (a + b - 1) // b * b


def _label_smoothing_kernel(tgt_ref, x_ref, out_ref, *, n_rows, padding_idx,
                            confidence, smooth_val, ent_const):
    x = x_ref[...]                                  # (TN, V) f32 log-probs
    tgt = tgt_ref[...]                              # (TN, 1) int32
    tn, v = x.shape

    col = jax.lax.broadcasted_iota(jnp.int32, (tn, v), 1)   # class index (lanes)

    # true_dist in {confidence, smooth_val, 0}; padding column forced to 0.
    true_dist = jnp.where(col == tgt, confidence, smooth_val)
    true_dist = jnp.where(col == padding_idx, 0.0, true_dist)

    # sum_j t_j * x_j  -> (TN, 1): one lane (XLU) reduce per tile.
    t_dot_x = jnp.sum(true_dist * x, axis=-1, keepdims=True)

    # sum_j t_j * log(t_j) is the same trace-time constant for every valid row.
    # Rows whose target is the padding index contribute exactly 0, and so do
    # out-of-range rows of the ragged last tile (their garbage x / tgt values
    # are eliminated by the select, never by arithmetic).
    row = (pl.program_id(0) * tn
           + jax.lax.broadcasted_iota(jnp.int32, (tn, 1), 0))
    valid = (row < n_rows) & (tgt != padding_idx)
    out_ref[...] = jnp.where(valid, ent_const - t_dot_x, 0.0).astype(jnp.float32)


def label_smoothing_loss(x, target, *, size, padding_idx, smoothing,
                         max_block_rows=1024, vmem_budget_bytes=24 << 20):
    """x: (N, size) float32 log-probs; target: (N,) int. Returns scalar f32."""
    assert x.ndim == 2 and x.shape[1] == size
    assert size > 2, "LabelSmoothing requires size > 2 (smoothing / (size - 2))"
    n, v = x.shape
    x = x.astype(jnp.float32)
    tgt_col = target.astype(jnp.int32).reshape(n, 1)

    confidence = 1.0 - float(smoothing)
    smooth_val = float(smoothing) / (size - 2)
    ent_const = _xlogx(confidence) + (size - 2) * _xlogx(smooth_val)

    # Row-tile size: multiple of 8, sized so 2x double-buffered x tiles stay
    # under the VMEM budget (v7x has only 64 MiB VMEM per TensorCore).
    bytes_per_row = v * 4
    rows_fit = max(8, (vmem_budget_bytes // (2 * bytes_per_row)) // 8 * 8)
    tn = max(8, min(max_block_rows, rows_fit, _round_up(n, 8)))

    grid_n = pl.cdiv(n, tn)
    n_out = grid_n * tn            # output padded to whole tiles; extra rows are 0

    kernel = functools.partial(
        _label_smoothing_kernel, n_rows=n, padding_idx=int(padding_idx),
        confidence=confidence, smooth_val=smooth_val, ent_const=ent_const)

    vmem_limit = int(min(64 << 20,
                         max(16 << 20, 2 * tn * bytes_per_row + (4 << 20))))

    row_losses = pl.pallas_call(
        kernel,
        out_shape=jax.ShapeDtypeStruct((n_out, 1), jnp.float32),
        grid=(grid_n,),
        in_specs=[
            pl.BlockSpec((tn, 1), lambda i: (i, 0)),   # target column (tiny tile)
            pl.BlockSpec((tn, v), lambda i: (i, 0)),   # x tile, full vocab per tile
        ],
        out_specs=pl.BlockSpec((tn, 1), lambda i: (i, 0)),
        compiler_params=pltpu.CompilerParams(
            dimension_semantics=("parallel",),
            vmem_limit_bytes=vmem_limit),
        cost_estimate=pl.CostEstimate(
            flops=6 * n * v,
            transcendentals=0,
            bytes_accessed=n * v * 4 + n * 4 + n_out * 4),
    )(tgt_col, x)

    # f32 per-row partials; final reduction tree in the wrapper.
    return jnp.sum(row_losses)


def _reference(x, target, *, size, padding_idx, smoothing):
    """Pure-JAX mirror of the PyTorch LabelSmoothing forward."""
    n, v = x.shape
    confidence = 1.0 - smoothing
    true_dist = jnp.full((n, v), smoothing / (size - 2), jnp.float32)
    true_dist = true_dist.at[jnp.arange(n), target].set(confidence)
    true_dist = true_dist.at[:, padding_idx].set(0.0)
    true_dist = jnp.where((target == padding_idx)[:, None], 0.0, true_dist)
    contrib = jnp.where(true_dist > 0.0,
                        true_dist * (jnp.log(jnp.maximum(true_dist, 1e-30)) - x),
                        0.0)
    return jnp.sum(contrib)


def _run_case(key, n, size, padding_idx, smoothing, **kwargs):
    k1, k2 = jax.random.split(key)
    logits = jax.random.normal(k1, (n, size), dtype=jnp.float32)
    x = jax.nn.log_softmax(logits, axis=-1)          # KLDivLoss takes log-probs
    target = jax.random.randint(k2, (n,), 0, size, dtype=jnp.int32)
    # Force some padding targets to exercise row masking.
    target = target.at[n // 3].set(padding_idx)
    target = target.at[(2 * n) // 3].set(padding_idx)

    loss = jax.block_until_ready(
        label_smoothing_loss(x, target, size=size, padding_idx=padding_idx,
                             smoothing=smoothing, **kwargs))
    ref = jax.block_until_ready(
        _reference(x, target, size=size, padding_idx=padding_idx,
                   smoothing=smoothing))
    assert jnp.allclose(loss, ref, rtol=1e-4, atol=1e-3), (loss, ref)


if __name__ == "__main__":
    key = jax.random.PRNGKey(0)
    k_small, k_big = jax.random.split(key)

    # Small case: single tile, matches the module's typical toy usage.
    _run_case(k_small, n=8, size=32, padding_idx=0, smoothing=0.1)

    # Larger ragged case: multi-tile grid (grid_n > 1) with a partial last
    # tile (300 % 128 != 0) to exercise the in-kernel row masking path.
    _run_case(k_big, n=300, size=512, padding_idx=0, smoothing=0.1,
              max_block_rows=128)

    print("KERNEL_OK")
</pallas_src>

<mosaic_0001>
module attributes {stable_mosaic.version = 11 : i64} {
  func.func @_label_smoothing_kernel(%arg0: i32, %arg1: memref<8x1xi32, #tpu.memory_space<vmem>>, %arg2: memref<8x32xf32, #tpu.memory_space<vmem>>, %arg3: memref<8x1xf32, #tpu.memory_space<vmem>>) attributes {dimension_semantics = [#tpu.dimension_semantics<parallel>], iteration_bounds = array<i64: 1>, scalar_prefetch = 0 : i64, scratch_operands = 0 : i64, tpu.core_type = #tpu.core_type<tc>, window_params = [{transform_indices = @transform_0, window_bounds = array<i64: 8, 1>}, {transform_indices = @transform_1, window_bounds = array<i64: 8, 32>}, {transform_indices = @transform_2, window_bounds = array<i64: 8, 1>}]} {
    %c0 = arith.constant 0 : index
    %c0_0 = arith.constant 0 : index
    %0 = vector.load %arg2[%c0, %c0_0] : memref<8x32xf32, #tpu.memory_space<vmem>>, vector<8x32xf32>
    %c0_1 = arith.constant 0 : index
    %c0_2 = arith.constant 0 : index
    %1 = vector.load %arg1[%c0_1, %c0_2] : memref<8x1xi32, #tpu.memory_space<vmem>>, vector<8x1xi32>
    %2 = tpu.iota {dimensions = array<i32: 1>} : vector<8x32xi32>
    %3 = vector.broadcast %1 : vector<8x1xi32> to vector<8x32xi32>
    %4 = arith.cmpi eq, %2, %3 : vector<8x32xi32>
    %cst = arith.constant 0.899999976 : f32
    %cst_3 = arith.constant 0.00333333341 : f32
    %5 = vector.broadcast %cst : f32 to vector<8x32xf32>
    %6 = vector.broadcast %cst_3 : f32 to vector<8x32xf32>
    %7 = arith.select %4, %5, %6 : vector<8x32xi1>, vector<8x32xf32>
    %c0_i32 = arith.constant 0 : i32
    %8 = vector.broadcast %c0_i32 : i32 to vector<8x32xi32>
    %9 = arith.cmpi eq, %2, %8 : vector<8x32xi32>
    %cst_4 = arith.constant 0.000000e+00 : f32
    %10 = vector.broadcast %cst_4 : f32 to vector<8x32xf32>
    %11 = arith.select %9, %10, %7 : vector<8x32xi1>, vector<8x32xf32>
    %12 = arith.mulf %11, %0 : vector<8x32xf32>
    %cst_5 = arith.constant dense<0.000000e+00> : vector<8xf32>
    %13 = vector.multi_reduction <add>, %12, %cst_5 [1] : vector<8x32xf32> to vector<8xf32>
    %14 = vector.shape_cast %13 : vector<8xf32> to vector<8x1xf32>
    %c8_i32 = arith.constant 8 : i32
    %15 = arith.muli %arg0, %c8_i32 : i32
    %16 = tpu.iota {dimensions = array<i32: 0>} : vector<8x1xi32>
    %17 = vector.broadcast %15 : i32 to vector<8x1xi32>
    %18 = arith.addi %17, %16 : vector<8x1xi32>
    %c8_i32_6 = arith.constant 8 : i32
    %19 = vector.broadcast %c8_i32_6 : i32 to vector<8x1xi32>
    %20 = arith.cmpi slt, %18, %19 : vector<8x1xi32>
    %c0_i32_7 = arith.constant 0 : i32
    %21 = vector.broadcast %c0_i32_7 : i32 to vector<8x1xi32>
    %22 = arith.cmpi ne, %1, %21 : vector<8x1xi32>
    %23 = arith.andi %20, %22 : vector<8x1xi1>
    %cst_8 = arith.constant -0.665202737 : f32
    %24 = vector.broadcast %cst_8 : f32 to vector<8x1xf32>
    %25 = arith.subf %24, %14 : vector<8x1xf32>
    %cst_9 = arith.constant 0.000000e+00 : f32
    %26 = vector.broadcast %cst_9 : f32 to vector<8x1xf32>
    %27 = arith.select %23, %25, %26 : vector<8x1xi1>, vector<8x1xf32>
    %c0_10 = arith.constant 0 : index
    %c0_11 = arith.constant 0 : index
    %28 = vector.load %arg3[%c0_10, %c0_11] : memref<8x1xf32, #tpu.memory_space<vmem>>, vector<8x1xf32>
    tpu.vector_store %arg3[%c0_10, %c0_11], %27 {strides = array<i32>} : memref<8x1xf32, #tpu.memory_space<vmem>>, vector<8x1xf32>,
    return
  }
  func.func @transform_0(%arg0: i32) -> (i32, i32) {
    %c0_i32 = arith.constant 0 : i32
    %c0_i32_0 = arith.constant 0 : i32
    return %arg0, %c0_i32 : i32, i32
  }
  func.func @transform_1(%arg0: i32) -> (i32, i32) {
    %c0_i32 = arith.constant 0 : i32
    %c0_i32_0 = arith.constant 0 : i32
    return %arg0, %c0_i32 : i32, i32
  }
  func.func @transform_2(%arg0: i32) -> (i32, i32) {
    %c0_i32 = arith.constant 0 : i32
    %c0_i32_0 = arith.constant 0 : i32
    return %arg0, %c0_i32 : i32, i32
  }
}

</mosaic_0001>

<llo_original>
// kernel: tpu_custom_call.1
$region0: #{tpu_custom_call.1}
  #allocation0 [shape = 'u32[]', space=smem, size = 0x4, offset = 0x4, fixed_abs, tag = 'smem constant byte address 0x4 - core index']
  #allocation1 [shape = 'u32[72,128]{1,0:T(1,128)}', space=vmem, size = 0x9000, scoped, tag = 'internal scratch']
  %s0 = inlined_call_operand.vmem [shape: s32[8,1], index: 0, kind: input, shape index: {}]
  %s1 = inlined_call_operand.vmem [shape: f32[8,32], index: 1, kind: input, shape index: {}]
  %s2 = inlined_call_operand.vmem [shape: f32[8,1], index: 2, kind: output, shape index: {}]
  %s3 = sld [smem:[#allocation0]]
  $region18: #{tpu_custom_call.1} parent=0
    _
  %s5 = ssub.s32 1, %s3
  %s6 = scalar_select 0, %s5, %s3
  // Predicated region
  $region2: #{tpu_custom_call.1} parent=0 // pred_check
    _
  $region3: #{tpu_custom_call.1} parent=0 // pred_check_branch
    %8 = sbr.rel (0) target = $region5
  $region4: #{tpu_custom_call.1} parent=0 // pred_region
    _
  $region5: #{tpu_custom_call.1} parent=0 // pred_fallthru
    _
  // Predicated region
  $region6: #{tpu_custom_call.1} parent=0 // pred_check
    _
  $region7: #{tpu_custom_call.1} parent=0 // pred_check_branch
    %10 = sbr.rel (0) target = $region9
  $region8: #{tpu_custom_call.1} parent=0 // pred_region
    _
  $region9: #{tpu_custom_call.1} parent=0 // pred_fallthru
    _
  %v11 = vld [vmem:[%s1] sm:$0xff]
  %v12 = vld [vmem:[%s0] sm:$0xff]
  %v13 = vlaneseq
  %v14 = vand.u32 %v13, 127
  %15 = vset.pattern.permute.xlu0 0
  %16 = vperm.xlu0 %15, %v12
  %v17 = vpop.permute.xlu0 %16
  %vm18 = vcmp.eq.s32.totalorder %v14, %v17
  %v19 = vsel %vm18, 0.9, 0.0033333334
  %vm20 = vcmp.eq.s32.totalorder %v14, 0
  %v21 = vsel %vm20, 0.0, %v19
  %v22 = vmul.f32 %v21, %v11
  %vm23 = vcmask 261120
  %v24 = vsel %vm23, %v22, 0.0
  %25 = vadd.xlane.f32.xlu0 %v24
  %v26 = vpop.xlane.xlu0 %25
  %s27 = smul.u32 0, 8
  %v28 = vlaneseq
  %v29 = vshrl.u32 %v28, 7
  %v30 = vstv %s27
  %v31 = vadd.s32 %v30, %v29
  %vm32 = vcmp.lt.s32.totalorder %v31, 8
  %vm33 = vcmp.ne.s32.totalorder %v12, 0
  %vm34 = vmand %vm32, %vm33
  %v35 = vsub.f32 -0.66520274, %v26
  %v36 = vsel %vm34, %v35, 0.0
  %vm37 = vcmask 7168
  %38 = vst.msk [vmem:[%s2] sm:$0xff] %vm37, %v36
  // Predicated region
  $region10: #{tpu_custom_call.1} parent=0 // pred_check
    _
  $region11: #{tpu_custom_call.1} parent=0 // pred_check_branch
    %40 = sbr.rel (0) target = $region13
  $region12: #{tpu_custom_call.1} parent=0 // pred_region
    _
  $region13: #{tpu_custom_call.1} parent=0 // pred_fallthru
    _
  // Predicated region
  $region14: #{tpu_custom_call.1} parent=0 // pred_check
    _
  $region15: #{tpu_custom_call.1} parent=0 // pred_check_branch
    %42 = sbr.rel (0) target = $region17
  $region16: #{tpu_custom_call.1} parent=0 // pred_region
    _
  $region17: #{tpu_custom_call.1} parent=0 // pred_fallthru
    _

</llo_original>
